<compile_context>
chip_gen: v7x
topology: tpu7x:2x2x1
jax: 0.10.0
libtpu: 0.0.40
codegen_flags: <defaults>
</compile_context>

<pallas_src>
import jax
import jax.numpy as jnp
from jax.experimental import pallas as pl
from jax.experimental.pallas import tpu as pltpu


def _identity_dma_kernel(x_hbm_ref, o_hbm_ref, copy_sem):
    # One full-array HBM -> HBM copy.  No VMEM bounce, no tiling.
    cp = pltpu.make_async_copy(x_hbm_ref, o_hbm_ref, copy_sem)
    cp.start()
    cp.wait()


def nonenorm_forward(x: jax.Array) -> jax.Array:
    """Identity forward pass (NoneNorm) as a single HBM->HBM DMA copy."""
    orig_shape = x.shape

    # 0-d corner case only: give the DMA a rank-1 view (layout-preserving
    # bitcast).  All other ranks are passed through untouched.
    xr = x.reshape(1) if x.ndim == 0 else x

    out = pl.pallas_call(
        _identity_dma_kernel,
        out_shape=jax.ShapeDtypeStruct(xr.shape, xr.dtype),
        # Raw HBM refs on both sides; Pallas generates no automatic DMA,
        # the kernel body owns the single explicit copy.
        in_specs=[pl.BlockSpec(memory_space=pl.ANY)],
        out_specs=pl.BlockSpec(memory_space=pl.ANY),
        scratch_shapes=[pltpu.SemaphoreType.DMA(())],
    )(xr)

    return out.reshape(orig_shape)


class NoneNormPallas:
    """Mirror of the PyTorch NoneNorm module (identity norm)."""

    def __init__(self, dim: int = 0, normparam: int = 0) -> None:
        # No learnable parameters; dim is stored only for API compatibility.
        self.num_features = dim

    def __call__(self, x: jax.Array) -> jax.Array:
        return nonenorm_forward(x)


if __name__ == "__main__":
    key = jax.random.PRNGKey(0)

    # NCHW input, small shape: batch=2, channels=4, spatial=16x16.
    x = jax.random.normal(key, (2, 4, 16, 16), dtype=jnp.float32)
    norm = NoneNormPallas(dim=4)
    y = jax.block_until_ready(norm(x))
    assert y.shape == x.shape and y.dtype == x.dtype
    assert bool(jnp.all(y == x))

    # Odd-shaped, narrow-lane, sub-32-bit input: would have stressed the old
    # tiled/VMEM path; the DMA path is shape/dtype agnostic.
    x_odd = jax.random.normal(jax.random.PRNGKey(1), (257, 96)).astype(jnp.bfloat16)
    y_odd = jax.block_until_ready(nonenorm_forward(x_odd))
    assert y_odd.shape == x_odd.shape and y_odd.dtype == x_odd.dtype
    assert bool(jnp.all(y_odd == x_odd))

    # 1-D input (previously reshaped to a single (1, N) block -> VMEM risk).
    x_1d = jax.random.normal(jax.random.PRNGKey(2), (1000,), dtype=jnp.float32)
    y_1d = jax.block_until_ready(nonenorm_forward(x_1d))
    assert y_1d.shape == x_1d.shape and bool(jnp.all(y_1d == x_1d))

    print("KERNEL_OK")
</pallas_src>

<mosaic_0001>
module attributes {stable_mosaic.version = 11 : i64} {
  func.func @_identity_dma_kernel(%arg0: memref<2x4x16x16xf32, #tpu.memory_space<any>>, %arg1: memref<2x4x16x16xf32, #tpu.memory_space<any>>, %arg2: memref<!tpu.dma_semaphore, #tpu.memory_space<semaphore_mem>>) attributes {dimension_semantics = [], scalar_prefetch = 0 : i64, scratch_operands = 1 : i64, tpu.core_type = #tpu.core_type<tc>} {
    tpu.enqueue_dma source(%arg0 : memref<2x4x16x16xf32, #tpu.memory_space<any>>) target(%arg1 : memref<2x4x16x16xf32, #tpu.memory_space<any>>) target_semaphore(%arg2 : memref<!tpu.dma_semaphore, #tpu.memory_space<semaphore_mem>>)
    tpu.wait_dma2 semaphore(%arg2 : memref<!tpu.dma_semaphore, #tpu.memory_space<semaphore_mem>>) src(%arg0 : memref<2x4x16x16xf32, #tpu.memory_space<any>>) dst(%arg1 : memref<2x4x16x16xf32, #tpu.memory_space<any>>)
    return
  }
}

</mosaic_0001>

<llo_original>
// kernel: tpu_custom_call.1
$region0: #{tpu_custom_call.1}
  #allocation0 [shape = 'u32[]', space=smem, size = 0x4, offset = 0x4, fixed_abs, tag = 'smem constant byte address 0x4 - core index']
  #allocation1 [shape = 'u32[144,128]{1,0:T(1,128)}', space=vmem, size = 0x12000, scoped, tag = 'internal scratch']
  #allocation2 [shape = 's32[1]{0}', space=sflag, size = 0x4, scoped, tag = 'scratch operand']
  #allocation3 [shape = 's32[]', space=sflag, size = 0x4, offset = 0, fixed_abs, tag = 'sflag constant byte address 0x0 - dummy sync flag']
  #allocation4 [shape = 'u32[0]{0}', space=smem, size = 0, offset = 0, fixed_abs, tag = 'smem constant byte address 0x0 - null']
  %s0 = inlined_call_operand.hbm [shape: f32[2,4,16,16], index: 0, kind: input, shape index: {}]
  %s1 = inlined_call_operand.hbm [shape: f32[2,4,16,16], index: 1, kind: output, shape index: {}]
  %s2 = sld [smem:[#allocation0]]
  $region2: #{tpu_custom_call.1} parent=0
    _
  %s4 = ssub.s32 1, %s2
  %s5 = scalar_select 0, %s4, %s2
  %s7 = sshll.u32 1, 14
  %s8 = sxor.u32 4294967295, %s7
  %s11 = sshll.u32 3, 24
  %s12 = sxor.u32 4294967295, %s11
  %s13 = sand.u32 0, %s12
  %s15 = sor.u32 %s13, 0
  %18 = dma.general %s0, 2048, %s1, [#allocation2], [#allocation3], [#allocation4], %s15, 0
  %s19 = smul.u32 2, 4
  %s20 = smul.u32 %s19, 16
  %s21 = smul.u32 %s20, 1
  %s22 = sshll.u32 %s21, 4
  %23 = dma.done [#allocation2], %s22
  %24 = vsyncmov [#allocation2]
  %s25 = vpop.sfrf %24
  %p26 = scmp.eq.s32.totalorder %s25, 0
  %p27 = pneg %p26
  %29 = shalt.err (%p27)

</llo_original>
